<compile_context>
chip_gen: v5e
topology: v5e:2x2
jax: 0.10.0
libtpu: 0.0.40
codegen_flags: <defaults>
</compile_context>

<pallas_src>
import math
import functools

import jax
import jax.numpy as jnp
from jax.experimental import pallas as pl
from jax.experimental.pallas import tpu as pltpu

BN_EPS = 1e-5    # nn.BatchNorm1d default eps
L2_EPS = 1e-12   # F.normalize default eps


# ----------------------------- hardware-aware budgets -----------------------------

@functools.lru_cache(maxsize=None)
def _vmem_capacity_bytes():
    try:
        info = pltpu.get_tpu_info()
        for name in ("vmem_capacity_bytes", "vmem_size_bytes", "vmem_bytes"):
            cap = getattr(info, name, None)
            if cap:
                return int(cap)
    except Exception:
        pass
    return 64 * 1024 * 1024     # conservative default: v7x per-TC VMEM


def _vmem_limit_bytes():
    return min(int(_vmem_capacity_bytes() * 3 // 4), 100 * 1024 * 1024)


def _tile_budget_bytes():
    return _vmem_capacity_bytes() // 4     # 16 MiB on v7x, 32 MiB on v5e/v6e


def _vmem_spec():
    # whole array resident in VMEM (single-block call)
    return pl.BlockSpec(memory_space=pltpu.MemorySpace.VMEM)


# ----------------------------- in-kernel helpers -----------------------------

def _dot_bf16(a, b):
    """MXU matmul: bf16 operands, f32 accumulation (native on v5e/v6e/v7x)."""
    return jnp.dot(a.astype(jnp.bfloat16), b.astype(jnp.bfloat16),
                   preferred_element_type=jnp.float32)


def _bn_train(x):
    """BatchNorm1d, training-mode batch stats; weight=1, bias=0 (as initialized)."""
    mu = jnp.mean(x, axis=0, keepdims=True)
    var = jnp.mean((x - mu) ** 2, axis=0, keepdims=True)
    return (x - mu) * jax.lax.rsqrt(var + BN_EPS)


def _l2norm(x):
    """F.normalize(x, p=2, dim=1)."""
    n = jnp.sqrt(jnp.sum(x * x, axis=1, keepdims=True))
    return x / jnp.maximum(n, L2_EPS)


def _softplus(x):
    return jnp.maximum(x, 0.0) + jnp.log(1.0 + jnp.exp(-jnp.abs(x)))


def _gnn_forward(X, An, w1, b1, w2, b2, w3, b3):
    """Shared GNNEncoder body (X already clipped, An already clipped + row-normalized)."""
    # feature_proj: Linear -> BN -> ReLU
    # TODO(synk): Dropout(0.2) after feature_proj ReLU treated as identity.
    H = jnp.maximum(_bn_train(_dot_bf16(X, w1) + b1), 0.0)
    # message_proj: Linear -> BN -> ReLU, aggregate with normalized adjacency
    M = jnp.maximum(_bn_train(_dot_bf16(H, w2) + b2), 0.0)
    Zp = H + _dot_bf16(An, M)
    # output_proj: Linear -> BN -> Tanh
    return jnp.tanh(_bn_train(_dot_bf16(Zp, w3) + b3))


# --------------------- 1) augmentation head (aug GNN + edge-MLP stats) ---------------------

def aug_head_kernel(a_ref, x_ref,
                    w1_ref, b1_ref, w2_ref, b2_ref, w3_ref, b3_ref,
                    w1a_ref, w1b_ref, w1c_ref, b1e_ref,
                    pi_ref, pj_ref, anorm_ref):
    A_raw = a_ref[...]
    X = jnp.clip(x_ref[...], -10.0, 10.0)
    A = jnp.clip(A_raw, 0.0, 1.0)
    An = A / (jnp.sum(A, axis=1, keepdims=True) + 1e-8)
    # Reused by the 3-view encoder; it is only ever consumed as a bf16 MXU operand,
    # so emit it in bf16 (halves the dominant (N,N) HBM write + later reads).
    anorm_ref[...] = An.astype(jnp.bfloat16)

    # aug_gnn encoder
    Hv = _gnn_forward(X, An, w1_ref[...], b1_ref[...], w2_ref[...], b2_ref[...],
                      w3_ref[...], b3_ref[...])
    hG = jnp.mean(Hv, axis=0, keepdims=True)

    # edge-MLP first layer decomposed:  feat_ij = [Hv_i + Hv_j, hG, 1]
    #   feat_ij @ W1 + b1 = Pc_i + Pc_j  with  Pc = Hv @ w1a + 0.5 * (hG @ w1b + w1c + b1)
    P = _dot_bf16(Hv, w1a_ref[...])                                     # (N, Hh)
    c = _dot_bf16(hG, w1b_ref[...]) + w1c_ref[...] + b1e_ref[...]       # (1, Hh)
    Pc = P + 0.5 * c

    # BatchNorm statistics over actual edges (A_raw != 0), computed algebraically —
    # never materializes the (N, N, Hh) tensor:
    #   sum_E lin   = sum_i dout_i*Pc_i           + colsum(M @ Pc)
    #   sum_E lin^2 = sum_i dout_i*Pc_i^2 + colsum(M @ Pc^2) + 2*colsum(Pc * (M @ Pc))
    mask = (A_raw != 0.0).astype(jnp.float32)
    dout = jnp.sum(mask, axis=1, keepdims=True)            # (N, 1) out-degrees
    ne = jnp.maximum(jnp.sum(dout), 1.0)                   # edge count (guarded)
    # bf16 MXU fast path for the two (N,N)x(N,Hh) stats matmuls (mask is exact in bf16;
    # the stats only feed scores used for stochastic gumbel top-k selection).
    mask_bf = mask.astype(jnp.bfloat16)
    MP = jnp.dot(mask_bf, Pc.astype(jnp.bfloat16), preferred_element_type=jnp.float32)
    MP2 = jnp.dot(mask_bf, (Pc * Pc).astype(jnp.bfloat16),
                  preferred_element_type=jnp.float32)
    s1 = jnp.sum(dout * Pc + MP, axis=0, keepdims=True)                  # (1, Hh)
    s2 = jnp.sum(dout * (Pc * Pc) + MP2 + 2.0 * Pc * MP, axis=0, keepdims=True)
    mu = s1 / ne
    var = jnp.maximum(s2 / ne - mu * mu, 0.0)              # biased var; clamp fp error
    inv = jax.lax.rsqrt(var + BN_EPS)

    # Fold the edge-BN mean/scale into the two pairwise operands:
    #   relu((Pc_i + Pc_j - mu) * inv) == relu(Pi'_i + Pj'_j)
    pi_ref[...] = Pc * inv                                  # i side
    pj_ref[...] = (Pc - mu) * inv                           # j side (transposed in wrapper)


def aug_head(A, X, gnn_p, edge_p):
    N, _ = X.shape
    Hh = edge_p['w1a'].shape[1]
    return pl.pallas_call(
        aug_head_kernel,
        out_shape=(jax.ShapeDtypeStruct((N, Hh), jnp.float32),    # Pi' = Pc*inv
                   jax.ShapeDtypeStruct((N, Hh), jnp.float32),    # Pj' = (Pc-mu)*inv
                   jax.ShapeDtypeStruct((N, N), jnp.bfloat16)),   # A_norm (bf16 operand)
        in_specs=[_vmem_spec() for _ in range(12)],
        out_specs=tuple(_vmem_spec() for _ in range(3)),
        compiler_params=pltpu.CompilerParams(vmem_limit_bytes=_vmem_limit_bytes()),
    )(A, X, gnn_p['w1'], gnn_p['b1'], gnn_p['w2'], gnn_p['b2'], gnn_p['w3'], gnn_p['b3'],
      edge_p['w1a'], edge_p['w1b'], edge_p['w1c'], edge_p['b1'])


# ------------------ 2) pairwise edge scores, row-tiled + empty-tile skip ------------------

def _row_tile(n, hh, budget_bytes):
    """Row tile (multiple of 8, <=512) such that ~4 live (TR, Hh, N) f32 slabs stay under
    the generation-aware VMEM budget. Never falls back to TR=N: rows are padded instead."""
    n_pad8 = ((n + 7) // 8) * 8
    cap = int(budget_bytes // (4 * max(n, 1) * max(hh, 1) * 4))
    tr = max(8, min(512, cap))
    tr -= tr % 8
    tr = max(tr, 8)
    tr = min(tr, n_pad8)
    # prefer an even number of tiles (balances the two TensorCores on v7x) when >1 tile
    if tr < n_pad8:
        while tr > 8 and pl.cdiv(n_pad8, tr) % 2 == 1:
            tr -= 8
    return tr


def edge_pair_kernel(cnt_ref, pi_ref, pjt_ref, w2_ref, b2_ref, y_ref):
    r = pl.program_id(0)

    @pl.when(cnt_ref[r] > 0)
    def _():
        Pi = pi_ref[...]                                    # (TR, Hh)  Pc*inv row tile
        PjT = pjt_ref[...]                                  # (Hh, N)   ((Pc-mu)*inv)^T
        # N on lanes: (TR, Hh, N) intermediate, BN already folded -> just add + relu.
        h = jnp.maximum(Pi[:, :, None] + PjT[None, :, :], 0.0)
        # TODO(synk): Dropout(0.3) in edge_mlp treated as identity.
        # final Linear(Hh -> 1): broadcast-multiply by w2 and reduce over the Hh
        # (sublane) axis — no bf16 cast of the big tensor, no lane-1 MXU output.
        w2b = w2_ref[...][None, :, :]                       # (1, Hh, 1)
        score = jnp.sum(h * w2b, axis=1)                    # (TR, N), lane-dense
        y_ref[...] = jnp.tanh(score + b2_ref[0, 0])

    @pl.when(cnt_ref[r] == 0)
    def _():
        # tile contains no edges (or is padding): downstream masks by (A != 0)
        y_ref[...] = jnp.zeros_like(y_ref)


def edge_scores(Pi_pad, PjT, w2, b2, tile_counts, TR, N):
    N_pad, Hh = Pi_pad.shape
    n_tiles = N_pad // TR
    grid_spec = pltpu.PrefetchScalarGridSpec(
        num_scalar_prefetch=1,
        grid=(n_tiles,),
        in_specs=[
            pl.BlockSpec((TR, Hh), lambda r, cnt: (r, 0)),   # Pi' row tile (i side)
            pl.BlockSpec((Hh, N), lambda r, cnt: (0, 0)),    # Pj'^T full   (j side)
            pl.BlockSpec((Hh, 1), lambda r, cnt: (0, 0)),    # edge_mlp w2
            pl.BlockSpec((1, 1), lambda r, cnt: (0, 0)),     # edge_mlp b2
        ],
        out_specs=pl.BlockSpec((TR, N), lambda r, cnt: (r, 0)),
    )
    return pl.pallas_call(
        edge_pair_kernel,
        out_shape=jax.ShapeDtypeStruct((N_pad, N), jnp.float32),
        grid_spec=grid_spec,
        compiler_params=pltpu.CompilerParams(
            dimension_semantics=("parallel",),               # megacore-splittable on v7x
            vmem_limit_bytes=_vmem_limit_bytes()),
    )(tile_counts, Pi_pad, PjT, w2, b2)


# --------------------- 3) fused encoder over the 3 views (orig/neg/aug) ---------------------

def encoder_views_kernel(an_ref, x_ref, w1_ref, b1_ref, w2_ref, b2_ref, w3_ref, b3_ref, z_ref):
    X = jnp.clip(x_ref[0], -10.0, 10.0)
    An = an_ref[0]                    # already clip(A,0,1) / (rowsum + 1e-8), bf16
    z_ref[0] = _gnn_forward(X, An, w1_ref[...], b1_ref[...], w2_ref[...], b2_ref[...],
                            w3_ref[...], b3_ref[...])


def encode_three_views(A_views, X_views, p):
    # View order (orig, neg, aug) so the (N,N) A block index sequence is 0,0,1 — the
    # largest DMA (A_norm) is fetched once instead of twice.
    # A_views: (2, N, N) bf16 = [A_norm, A_aug_norm];   views 0,1 -> 0, view 2 -> 1
    # X_views: (2, N, F) bf16 = [X, X_neg];             views 0,2 -> 0, view 1 -> 1
    _, N, F = X_views.shape
    Hd = p['w1'].shape[1]
    grid_spec = pltpu.PrefetchScalarGridSpec(
        num_scalar_prefetch=0,
        grid=(3,),
        in_specs=[
            pl.BlockSpec((1, N, N), lambda v: (v // 2, 0, 0)),       # A: 0,0,1
            pl.BlockSpec((1, N, F), lambda v: (v * (2 - v), 0, 0)),  # X: 0,1,0
            pl.BlockSpec((F, Hd), lambda v: (0, 0)),
            pl.BlockSpec((1, Hd), lambda v: (0, 0)),
            pl.BlockSpec((Hd, Hd), lambda v: (0, 0)),
            pl.BlockSpec((1, Hd), lambda v: (0, 0)),
            pl.BlockSpec((Hd, Hd), lambda v: (0, 0)),
            pl.BlockSpec((1, Hd), lambda v: (0, 0)),
        ],
        out_specs=pl.BlockSpec((1, N, Hd), lambda v: (v, 0, 0)),
    )
    return pl.pallas_call(
        encoder_views_kernel,
        out_shape=jax.ShapeDtypeStruct((3, N, Hd), jnp.float32),
        grid_spec=grid_spec,
        compiler_params=pltpu.CompilerParams(
            dimension_semantics=("parallel",),
            vmem_limit_bytes=_vmem_limit_bytes()),
    )(A_views, X_views, p['w1'], p['b1'], p['w2'], p['b2'], p['w3'], p['b3'])


# ----------------------------- 4) fused multi-scale losses -----------------------------

def losses_kernel(z_ref, x_ref, xn_ref, pw1_ref, pb1_ref, pw2_ref, pb2_ref,
                  zco_ref, zca_ref, ac_ref, out_ref, *, tau, alpha, beta, gamma):
    # view order from encode_three_views: 0 = orig, 1 = neg, 2 = aug
    Zo = jnp.clip(z_ref[0], -5.0, 5.0)
    Zn = jnp.clip(z_ref[1], -5.0, 5.0)
    Za = jnp.clip(z_ref[2], -5.0, 5.0)

    # ---- graph-level contrastive loss ----
    zg = _l2norm(jnp.mean(Zo, axis=0, keepdims=True))
    Zo_n = _l2norm(Zo)
    pos = jnp.clip(jnp.sum(Zo_n * zg, axis=1, keepdims=True) / tau, -10.0, 10.0)
    neg = jnp.clip(jnp.sum(_l2norm(Zn) * zg, axis=1, keepdims=True) / tau, -10.0, 10.0)
    loss_graph = jnp.clip(
        0.5 * (jnp.mean(_softplus(-pos), keepdims=True)
               + jnp.mean(_softplus(neg), keepdims=True)), 0.0, 10.0)

    # ---- node-level contrastive loss ----
    X = jnp.clip(x_ref[...], -10.0, 10.0)
    Xn = jnp.clip(xn_ref[...], -10.0, 10.0)

    def proj(x):
        # proj_head: Linear -> BN -> ReLU -> (Dropout=identity) -> Linear -> Tanh
        # TODO(synk): Dropout(0.2) in proj_head treated as identity.
        h = jnp.maximum(_bn_train(_dot_bf16(x, pw1_ref[...]) + pb1_ref[...]), 0.0)
        return jnp.tanh(_dot_bf16(h, pw2_ref[...]) + pb2_ref[...])

    posn = jnp.clip(jnp.sum(Zo_n * _l2norm(proj(X)), axis=1, keepdims=True) / tau,
                    -10.0, 10.0)
    negn = jnp.clip(jnp.sum(Zo_n * _l2norm(proj(Xn)), axis=1, keepdims=True) / tau,
                    -10.0, 10.0)
    loss_node = jnp.clip(
        0.5 * (jnp.mean(_softplus(-posn), keepdims=True)
               + jnp.mean(_softplus(negn), keepdims=True)), 0.0, 10.0)

    # ---- subgraph-level contrastive loss ----
    Zc_o = jnp.clip(zco_ref[...], -5.0, 5.0)          # center rows (gathered in JAX)
    Zc_a = jnp.clip(zca_ref[...], -5.0, 5.0)
    Ac = ac_ref[...]                                  # (B, N) center rows of raw-A norm
    sum_o = _l2norm(Zc_o + 0.5 * _dot_bf16(Ac, Zo))   # bf16 MXU fast path
    sum_a = _l2norm(Zc_a + 0.5 * _dot_bf16(Ac, Za))
    logits = jax.lax.dot_general(sum_o, sum_a, (((1,), (1,)), ((), ())),
                                 preferred_element_type=jnp.float32) / tau
    logits = jnp.clip(logits, -10.0, 10.0)            # (B, B)
    B = logits.shape[0]
    m = jnp.max(logits, axis=1, keepdims=True)
    lse = jnp.log(jnp.sum(jnp.exp(logits - m), axis=1, keepdims=True)) + m
    rows = jax.lax.broadcasted_iota(jnp.int32, (B, B), 0)
    cols = jax.lax.broadcasted_iota(jnp.int32, (B, B), 1)
    diag = jnp.sum(jnp.where(rows == cols, logits, 0.0), axis=1, keepdims=True)
    loss_sub = jnp.mean(lse - diag, keepdims=True)

    out_ref[...] = jnp.clip(alpha * loss_graph + beta * loss_node + gamma * loss_sub,
                            0.0, 20.0)


def fused_losses(Z_views, X, X_neg, proj_p, Zc_o, Zc_a, Ac, *, tau, alpha, beta, gamma):
    return pl.pallas_call(
        functools.partial(losses_kernel, tau=tau, alpha=alpha, beta=beta, gamma=gamma),
        out_shape=jax.ShapeDtypeStruct((1, 1), jnp.float32),
        in_specs=[_vmem_spec() for _ in range(10)],
        out_specs=_vmem_spec(),
        compiler_params=pltpu.CompilerParams(vmem_limit_bytes=_vmem_limit_bytes()),
    )(Z_views, X, X_neg, proj_p['w1'], proj_p['b1'], proj_p['w2'], proj_p['b2'],
      Zc_o, Zc_a, Ac)[0, 0]


# ----------------------------- parameter initialization -----------------------------

def init_params(key, input_dim, hidden_dim):
    # kaiming_normal_(fan_in, relu): std = sqrt(2 / fan_in); biases zero (per _init_weights)
    def lin(k, fi, fo):
        return jax.random.normal(k, (fi, fo), jnp.float32) * math.sqrt(2.0 / fi)

    keys = jax.random.split(key, 10)

    def gnn(ks):
        return dict(
            w1=lin(ks[0], input_dim, hidden_dim), b1=jnp.zeros((1, hidden_dim), jnp.float32),
            w2=lin(ks[1], hidden_dim, hidden_dim), b2=jnp.zeros((1, hidden_dim), jnp.float32),
            w3=lin(ks[2], hidden_dim, hidden_dim), b3=jnp.zeros((1, hidden_dim), jnp.float32))

    aug_gnn = gnn(keys[0:3])
    encoder = gnn(keys[3:6])

    half = hidden_dim // 2
    W1 = lin(keys[6], 2 * hidden_dim + 1, half)        # edge_mlp first Linear (2H+1, H//2)
    edge_mlp = dict(
        w1a=W1[:hidden_dim],                           # acts on Hv_i + Hv_j
        w1b=W1[hidden_dim:2 * hidden_dim],             # acts on h_G
        w1c=W1[2 * hidden_dim:],                       # acts on the constant 1.0
        b1=jnp.zeros((1, half), jnp.float32),
        w2=lin(keys[7], half, 1),
        b2=jnp.zeros((1, 1), jnp.float32))

    proj_head = dict(
        w1=lin(keys[8], input_dim, hidden_dim), b1=jnp.zeros((1, hidden_dim), jnp.float32),
        w2=lin(keys[9], hidden_dim, hidden_dim), b2=jnp.zeros((1, hidden_dim), jnp.float32))

    return dict(aug_gnn=aug_gnn, encoder=encoder, edge_mlp=edge_mlp, proj_head=proj_head)


def _cast_weights_bf16(p, names=('w1', 'w2', 'w3')):
    """Pre-cast MXU-operand weights to bf16 once in the wrapper (biases stay f32)."""
    q = dict(p)
    for n in names:
        if n in q:
            q[n] = q[n].astype(jnp.bfloat16)
    return q


# --------------------------------- MSCIA forward ---------------------------------

def mscia_forward(params, A, X, center_indices, key, *,
                  k_ratio, alpha, beta, gamma, tau):
    N = A.shape[0]
    Hh = params['edge_mlp']['w1a'].shape[1]

    # ---- EdgeSamplingHead: aug GNN + edge-MLP stats (1 kernel), then tiled pair scores ----
    Pi, Pj, A_norm = aug_head(A, X, params['aug_gnn'], params['edge_mlp'])
    PjT = jnp.transpose(Pj)                              # (Hh, N): N on lanes for the pair kernel

    TR = _row_tile(N, Hh, _tile_budget_bytes())
    n_tiles = pl.cdiv(N, TR)
    N_pad = n_tiles * TR
    pad = N_pad - N
    mask_rows = (A != 0.0)
    if pad:
        Pi_pad = jnp.pad(Pi, ((0, pad), (0, 0)))
        mask_rows = jnp.pad(mask_rows, ((0, pad), (0, 0)))
    else:
        Pi_pad = Pi
    tile_counts = jnp.sum(mask_rows.reshape(n_tiles, TR * N),
                          axis=1).astype(jnp.int32)      # per-row-tile edge counts
    y_pad = edge_scores(Pi_pad, PjT, params['edge_mlp']['w2'], params['edge_mlp']['b2'],
                        tile_counts, TR, N)              # (N_pad, N) pair scores
    y = y_pad[:N] if pad else y_pad

    # ---- gumbel top-k edge selection (exact k, like torch.topk) ----
    k_gumbel, k_perm = jax.random.split(key)
    u = jnp.clip(jax.random.uniform(k_gumbel, (N * N,), jnp.float32), 1e-7, 1.0 - 1e-7)
    gumbel = -jnp.log(-jnp.log(u + 1e-8) + 1e-8)
    is_edge = (A.reshape(-1) != 0.0)
    pert = jnp.where(is_edge, y.reshape(-1) + gumbel, -jnp.inf)
    # TODO(synk): dynamic num_keep needs a host sync (static k for top_k); forward not jitted.
    n_edges = int(jnp.sum(is_edge))
    num_keep = max(1, int(k_ratio * n_edges))
    _, top_idx = jax.lax.top_k(pert, num_keep)
    keep = jnp.zeros((N * N,), jnp.bool_).at[top_idx].set(True) & is_edge
    A_aug = jnp.where(keep.reshape(N, N), A, 0.0)

    # ---- negative view (X permuted along nodes) ----
    perm = jax.random.permutation(k_perm, N)
    X_neg = X[perm]

    # ---- shared encoder over the 3 views in one pallas_call (bf16 A/X views + weights) ----
    A_aug_cl = jnp.clip(A_aug, 0.0, 1.0)
    A_aug_norm = A_aug_cl / (jnp.sum(A_aug_cl, axis=1, keepdims=True) + 1e-8)
    A_views = jnp.stack([A_norm, A_aug_norm.astype(jnp.bfloat16)])      # (2, N, N) bf16
    X_views = jnp.stack([X, X_neg]).astype(jnp.bfloat16)                # (2, N, F) bf16
    enc_bf16 = _cast_weights_bf16(params['encoder'])
    Z_views = encode_three_views(A_views, X_views, enc_bf16)            # (3, N, H) [o, n, a]

    # ---- subgraph-loss gathers: direct row gathers instead of one-hot matmuls ----
    ci = jnp.asarray(center_indices, jnp.int32)
    deg_raw = jnp.sum(A, axis=1, keepdims=True) + 1e-8        # raw-A degrees (spec-faithful)
    Ac = A[ci] / deg_raw[ci]                                  # (B, N) center rows of A_norm
    Zc_o = Z_views[0][ci]                                     # (B, H) orig
    Zc_a = Z_views[2][ci]                                     # (B, H) aug

    # ---- fused multi-scale losses (one kernel, one scalar out) ----
    proj_bf16 = _cast_weights_bf16(params['proj_head'], names=('w1', 'w2'))
    total = fused_losses(Z_views, X, X_neg, proj_bf16, Zc_o, Zc_a, Ac,
                         tau=tau, alpha=alpha, beta=beta, gamma=gamma)
    return total, Z_views[0]


# ------------------------------------- main -------------------------------------

if __name__ == "__main__":
    key = jax.random.PRNGKey(0)
    k_A, k_X, k_params, k_fwd = jax.random.split(key, 4)

    N, F_dim, H_dim = 8, 16, 32                      # nodes, input_dim, hidden_dim
    A_rand = (jax.random.uniform(k_A, (N, N)) < 0.4).astype(jnp.float32)
    A = jnp.maximum(A_rand, A_rand.T)
    A = A * (1.0 - jnp.eye(N, dtype=jnp.float32))    # symmetric, no self-loops
    X = jax.random.normal(k_X, (N, F_dim), jnp.float32)
    center_indices = jnp.array([0, 2, 5, 7], dtype=jnp.int32)

    params = init_params(k_params, F_dim, H_dim)

    total_loss, Z_orig = mscia_forward(
        params, A, X, center_indices, k_fwd,
        k_ratio=0.5, alpha=0.4, beta=0.3, gamma=0.3, tau=0.2)

    jax.block_until_ready((total_loss, Z_orig))
    assert Z_orig.shape == (N, H_dim)
    assert bool(jnp.isfinite(total_loss))
    print("KERNEL_OK")
</pallas_src>

<mosaic_0001>
module attributes {stable_mosaic.version = 11 : i64} {
  func.func @aug_head_kernel(%arg0: memref<8x8xf32, #tpu.memory_space<vmem>>, %arg1: memref<8x16xf32, #tpu.memory_space<vmem>>, %arg2: memref<16x32xf32, #tpu.memory_space<vmem>>, %arg3: memref<1x32xf32, #tpu.memory_space<vmem>>, %arg4: memref<32x32xf32, #tpu.memory_space<vmem>>, %arg5: memref<1x32xf32, #tpu.memory_space<vmem>>, %arg6: memref<32x32xf32, #tpu.memory_space<vmem>>, %arg7: memref<1x32xf32, #tpu.memory_space<vmem>>, %arg8: memref<32x16xf32, #tpu.memory_space<vmem>>, %arg9: memref<32x16xf32, #tpu.memory_space<vmem>>, %arg10: memref<1x16xf32, #tpu.memory_space<vmem>>, %arg11: memref<1x16xf32, #tpu.memory_space<vmem>>, %arg12: memref<8x16xf32, #tpu.memory_space<vmem>>, %arg13: memref<8x16xf32, #tpu.memory_space<vmem>>, %arg14: memref<8x8xbf16, #tpu.memory_space<vmem>>) attributes {dimension_semantics = [], scalar_prefetch = 0 : i64, scratch_operands = 0 : i64, tpu.core_type = #tpu.core_type<tc>} {
    %c0 = arith.constant 0 : index
    %c0_0 = arith.constant 0 : index
    %0 = vector.load %arg0[%c0, %c0_0] : memref<8x8xf32, #tpu.memory_space<vmem>>, vector<8x8xf32>
    %c0_1 = arith.constant 0 : index
    %c0_2 = arith.constant 0 : index
    %1 = vector.load %arg1[%c0_1, %c0_2] : memref<8x16xf32, #tpu.memory_space<vmem>>, vector<8x16xf32>
    %cst = arith.constant -1.000000e+01 : f32
    %cst_3 = arith.constant 1.000000e+01 : f32
    %2 = vector.broadcast %cst : f32 to vector<8x16xf32>
    %3 = arith.maximumf %2, %1 : vector<8x16xf32>
    %4 = vector.broadcast %cst_3 : f32 to vector<8x16xf32>
    %5 = arith.minimumf %4, %3 : vector<8x16xf32>
    %cst_4 = arith.constant 0.000000e+00 : f32
    %cst_5 = arith.constant 1.000000e+00 : f32
    %6 = vector.broadcast %cst_4 : f32 to vector<8x8xf32>
    %7 = arith.maximumf %6, %0 : vector<8x8xf32>
    %8 = vector.broadcast %cst_5 : f32 to vector<8x8xf32>
    %9 = arith.minimumf %8, %7 : vector<8x8xf32>
    %cst_6 = arith.constant dense<0.000000e+00> : vector<8xf32>
    %10 = vector.multi_reduction <add>, %9, %cst_6 [1] : vector<8x8xf32> to vector<8xf32>
    %11 = vector.shape_cast %10 : vector<8xf32> to vector<8x1xf32>
    %cst_7 = arith.constant 9.99999993E-9 : f32
    %12 = vector.broadcast %cst_7 : f32 to vector<8x1xf32>
    %13 = arith.addf %11, %12 : vector<8x1xf32>
    %14 = vector.broadcast %13 : vector<8x1xf32> to vector<8x8xf32>
    %15 = arith.divf %9, %14 : vector<8x8xf32>
    %16 = arith.truncf %15 : vector<8x8xf32> to vector<8x8xbf16>
    %c0_8 = arith.constant 0 : index
    %c0_9 = arith.constant 0 : index
    %17 = vector.load %arg14[%c0_8, %c0_9] : memref<8x8xbf16, #tpu.memory_space<vmem>>, vector<8x8xbf16>
    tpu.vector_store %arg14[%c0_8, %c0_9], %16 {strides = array<i32>} : memref<8x8xbf16, #tpu.memory_space<vmem>>, vector<8x8xbf16>,
    %c0_10 = arith.constant 0 : index
    %c0_11 = arith.constant 0 : index
    %18 = vector.load %arg2[%c0_10, %c0_11] : memref<16x32xf32, #tpu.memory_space<vmem>>, vector<16x32xf32>
    %c0_12 = arith.constant 0 : index
    %c0_13 = arith.constant 0 : index
    %19 = vector.load %arg3[%c0_12, %c0_13] : memref<1x32xf32, #tpu.memory_space<vmem>>, vector<1x32xf32>
    %c0_14 = arith.constant 0 : index
    %c0_15 = arith.constant 0 : index
    %20 = vector.load %arg4[%c0_14, %c0_15] : memref<32x32xf32, #tpu.memory_space<vmem>>, vector<32x32xf32>
    %c0_16 = arith.constant 0 : index
    %c0_17 = arith.constant 0 : index
    %21 = vector.load %arg5[%c0_16, %c0_17] : memref<1x32xf32, #tpu.memory_space<vmem>>, vector<1x32xf32>
    %c0_18 = arith.constant 0 : index
    %c0_19 = arith.constant 0 : index
    %22 = vector.load %arg6[%c0_18, %c0_19] : memref<32x32xf32, #tpu.memory_space<vmem>>, vector<32x32xf32>
    %c0_20 = arith.constant 0 : index
    %c0_21 = arith.constant 0 : index
    %23 = vector.load %arg7[%c0_20, %c0_21] : memref<1x32xf32, #tpu.memory_space<vmem>>, vector<1x32xf32>
    %24 = arith.truncf %5 : vector<8x16xf32> to vector<8x16xbf16>
    %25 = arith.truncf %18 : vector<16x32xf32> to vector<16x32xbf16>
    %cst_22 = arith.constant dense<0.000000e+00> : vector<8x32xf32>
    %26 = tpu.matmul %24, %25, %cst_22 {dimension_numbers = #tpu.dot_dimension_numbers<[1], [0], [0], [1], [0, 0, 1, 1], [], []>} : vector<8x16xbf16>, vector<16x32xbf16>, vector<8x32xf32> -> vector<8x32xf32>
    %27 = vector.broadcast %19 : vector<1x32xf32> to vector<8x32xf32>
    %28 = arith.addf %26, %27 : vector<8x32xf32>
    %cst_23 = arith.constant dense<0.000000e+00> : vector<32xf32>
    %29 = vector.multi_reduction <add>, %28, %cst_23 [0] : vector<8x32xf32> to vector<32xf32>
    %30 = vector.shape_cast %29 : vector<32xf32> to vector<1x32xf32>
    %cst_24 = arith.constant 8.000000e+00 : f32
    %31 = vector.broadcast %cst_24 : f32 to vector<1x32xf32>
    %32 = arith.divf %30, %31 : vector<1x32xf32>
    %33 = vector.broadcast %32 : vector<1x32xf32> to vector<8x32xf32>
    %34 = arith.subf %28, %33 : vector<8x32xf32>
    %35 = arith.mulf %34, %34 : vector<8x32xf32>
    %cst_25 = arith.constant dense<0.000000e+00> : vector<32xf32>
    %36 = vector.multi_reduction <add>, %35, %cst_25 [0] : vector<8x32xf32> to vector<32xf32>
    %37 = vector.shape_cast %36 : vector<32xf32> to vector<1x32xf32>
    %cst_26 = arith.constant 8.000000e+00 : f32
    %38 = vector.broadcast %cst_26 : f32 to vector<1x32xf32>
    %39 = arith.divf %37, %38 : vector<1x32xf32>
    %40 = vector.broadcast %32 : vector<1x32xf32> to vector<8x32xf32>
    %41 = arith.subf %28, %40 : vector<8x32xf32>
    %cst_27 = arith.constant 9.99999974E-6 : f32
    %42 = vector.broadcast %cst_27 : f32 to vector<1x32xf32>
    %43 = arith.addf %39, %42 : vector<1x32xf32>
    %44 = math.rsqrt %43 : vector<1x32xf32>
    %45 = vector.broadcast %44 : vector<1x32xf32> to vector<8x32xf32>
    %46 = arith.mulf %41, %45 : vector<8x32xf32>
    %cst_28 = arith.constant 0.000000e+00 : f32
    %47 = vector.broadcast %cst_28 : f32 to vector<8x32xf32>
    %48 = arith.maximumf %46, %47 : vector<8x32xf32>
    %49 = arith.truncf %48 : vector<8x32xf32> to vector<8x32xbf16>
    %50 = arith.truncf %20 : vector<32x32xf32> to vector<32x32xbf16>
    %cst_29 = arith.constant dense<0.000000e+00> : vector<8x32xf32>
    %51 = tpu.matmul %49, %50, %cst_29 {dimension_numbers = #tpu.dot_dimension_numbers<[1], [0], [0], [1], [0, 0, 1, 1], [], []>} : vector<8x32xbf16>, vector<32x32xbf16>, vector<8x32xf32> -> vector<8x32xf32>
    %52 = vector.broadcast %21 : vector<1x32xf32> to vector<8x32xf32>
    %53 = arith.addf %51, %52 : vector<8x32xf32>
    %cst_30 = arith.constant dense<0.000000e+00> : vector<32xf32>
    %54 = vector.multi_reduction <add>, %53, %cst_30 [0] : vector<8x32xf32> to vector<32xf32>
    %55 = vector.shape_cast %54 : vector<32xf32> to vector<1x32xf32>
    %cst_31 = arith.constant 8.000000e+00 : f32
    %56 = vector.broadcast %cst_31 : f32 to vector<1x32xf32>
    %57 = arith.divf %55, %56 : vector<1x32xf32>
    %58 = vector.broadcast %57 : vector<1x32xf32> to vector<8x32xf32>
    %59 = arith.subf %53, %58 : vector<8x32xf32>
    %60 = arith.mulf %59, %59 : vector<8x32xf32>
    %cst_32 = arith.constant dense<0.000000e+00> : vector<32xf32>
    %61 = vector.multi_reduction <add>, %60, %cst_32 [0] : vector<8x32xf32> to vector<32xf32>
    %62 = vector.shape_cast %61 : vector<32xf32> to vector<1x32xf32>
    %cst_33 = arith.constant 8.000000e+00 : f32
    %63 = vector.broadcast %cst_33 : f32 to vector<1x32xf32>
    %64 = arith.divf %62, %63 : vector<1x32xf32>
    %65 = vector.broadcast %57 : vector<1x32xf32> to vector<8x32xf32>
    %66 = arith.subf %53, %65 : vector<8x32xf32>
    %cst_34 = arith.constant 9.99999974E-6 : f32
    %67 = vector.broadcast %cst_34 : f32 to vector<1x32xf32>
    %68 = arith.addf %64, %67 : vector<1x32xf32>
    %69 = math.rsqrt %68 : vector<1x32xf32>
    %70 = vector.broadcast %69 : vector<1x32xf32> to vector<8x32xf32>
    %71 = arith.mulf %66, %70 : vector<8x32xf32>
    %cst_35 = arith.constant 0.000000e+00 : f32
    %72 = vector.broadcast %cst_35 : f32 to vector<8x32xf32>
    %73 = arith.maximumf %71, %72 : vector<8x32xf32>
    %74 = arith.truncf %15 : vector<8x8xf32> to vector<8x8xbf16>
    %75 = arith.truncf %73 : vector<8x32xf32> to vector<8x32xbf16>
    %cst_36 = arith.constant dense<0.000000e+00> : vector<8x32xf32>
    %76 = tpu.matmul %74, %75, %cst_36 {dimension_numbers = #tpu.dot_dimension_numbers<[1], [0], [0], [1], [0, 0, 1, 1], [], []>} : vector<8x8xbf16>, vector<8x32xbf16>, vector<8x32xf32> -> vector<8x32xf32>
    %77 = arith.addf %48, %76 : vector<8x32xf32>
    %78 = arith.truncf %77 : vector<8x32xf32> to vector<8x32xbf16>
    %79 = arith.truncf %22 : vector<32x32xf32> to vector<32x32xbf16>
    %cst_37 = arith.constant dense<0.000000e+00> : vector<8x32xf32>
    %80 = tpu.matmul %78, %79, %cst_37 {dimension_numbers = #tpu.dot_dimension_numbers<[1], [0], [0], [1], [0, 0, 1, 1], [], []>} : vector<8x32xbf16>, vector<32x32xbf16>, vector<8x32xf32> -> vector<8x32xf32>
    %81 = vector.broadcast %23 : vector<1x32xf32> to vector<8x32xf32>
    %82 = arith.addf %80, %81 : vector<8x32xf32>
    %cst_38 = arith.constant dense<0.000000e+00> : vector<32xf32>
    %83 = vector.multi_reduction <add>, %82, %cst_38 [0] : vector<8x32xf32> to vector<32xf32>
    %84 = vector.shape_cast %83 : vector<32xf32> to vector<1x32xf32>
    %cst_39 = arith.constant 8.000000e+00 : f32
    %85 = vector.broadcast %cst_39 : f32 to vector<1x32xf32>
    %86 = arith.divf %84, %85 : vector<1x32xf32>
    %87 = vector.broadcast %86 : vector<1x32xf32> to vector<8x32xf32>
    %88 = arith.subf %82, %87 : vector<8x32xf32>
    %89 = arith.mulf %88, %88 : vector<8x32xf32>
    %cst_40 = arith.constant dense<0.000000e+00> : vector<32xf32>
    %90 = vector.multi_reduction <add>, %89, %cst_40 [0] : vector<8x32xf32> to vector<32xf32>
    %91 = vector.shape_cast %90 : vector<32xf32> to vector<1x32xf32>
    %cst_41 = arith.constant 8.000000e+00 : f32
    %92 = vector.broadcast %cst_41 : f32 to vector<1x32xf32>
    %93 = arith.divf %91, %92 : vector<1x32xf32>
    %94 = vector.broadcast %86 : vector<1x32xf32> to vector<8x32xf32>
    %95 = arith.subf %82, %94 : vector<8x32xf32>
    %cst_42 = arith.constant 9.99999974E-6 : f32
    %96 = vector.broadcast %cst_42 : f32 to vector<1x32xf32>
    %97 = arith.addf %93, %96 : vector<1x32xf32>
    %98 = math.rsqrt %97 : vector<1x32xf32>
    %99 = vector.broadcast %98 : vector<1x32xf32> to vector<8x32xf32>
    %100 = arith.mulf %95, %99 : vector<8x32xf32>
    %101 = math.tanh %100 : vector<8x32xf32>
    %cst_43 = arith.constant dense<0.000000e+00> : vector<32xf32>
    %102 = vector.multi_reduction <add>, %101, %cst_43 [0] : vector<8x32xf32> to vector<32xf32>
    %103 = vector.shape_cast %102 : vector<32xf32> to vector<1x32xf32>
    %cst_44 = arith.constant 8.000000e+00 : f32
    %104 = vector.broadcast %cst_44 : f32 to vector<1x32xf32>
    %105 = arith.divf %103, %104 : vector<1x32xf32>
    %c0_45 = arith.constant 0 : index
    %c0_46 = arith.constant 0 : index
    %106 = vector.load %arg8[%c0_45, %c0_46] : memref<32x16xf32, #tpu.memory_space<vmem>>, vector<32x16xf32>
    %107 = arith.truncf %101 : vector<8x32xf32> to vector<8x32xbf16>
    %108 = arith.truncf %106 : vector<32x16xf32> to vector<32x16xbf16>
    %cst_47 = arith.constant dense<0.000000e+00> : vector<8x16xf32>
    %109 = tpu.matmul %107, %108, %cst_47 {dimension_numbers = #tpu.dot_dimension_numbers<[1], [0], [0], [1], [0, 0, 1, 1], [], []>} : vector<8x32xbf16>, vector<32x16xbf16>, vector<8x16xf32> -> vector<8x16xf32>
    %c0_48 = arith.constant 0 : index
    %c0_49 = arith.constant 0 : index
    %110 = vector.load %arg9[%c0_48, %c0_49] : memref<32x16xf32, #tpu.memory_space<vmem>>, vector<32x16xf32>
    %111 = arith.truncf %105 : vector<1x32xf32> to vector<1x32xbf16>
    %112 = arith.truncf %110 : vector<32x16xf32> to vector<32x16xbf16>
    %cst_50 = arith.constant dense<0.000000e+00> : vector<1x16xf32>
    %113 = tpu.matmul %111, %112, %cst_50 {dimension_numbers = #tpu.dot_dimension_numbers<[1], [0], [0], [1], [0, 0, 1, 1], [], []>} : vector<1x32xbf16>, vector<32x16xbf16>, vector<1x16xf32> -> vector<1x16xf32>
    %c0_51 = arith.constant 0 : index
    %c0_52 = arith.constant 0 : index
    %114 = vector.load %arg10[%c0_51, %c0_52] : memref<1x16xf32, #tpu.memory_space<vmem>>, vector<1x16xf32>
    %115 = arith.addf %113, %114 : vector<1x16xf32>
    %c0_53 = arith.constant 0 : index
    %c0_54 = arith.constant 0 : index
    %116 = vector.load %arg11[%c0_53, %c0_54] : memref<1x16xf32, #tpu.memory_space<vmem>>, vector<1x16xf32>
    %117 = arith.addf %115, %116 : vector<1x16xf32>
    %cst_55 = arith.constant 5.000000e-01 : f32
    %118 = vector.broadcast %cst_55 : f32 to vector<1x16xf32>
    %119 = arith.mulf %118, %117 : vector<1x16xf32>
    %120 = vector.broadcast %119 : vector<1x16xf32> to vector<8x16xf32>
    %121 = arith.addf %109, %120 : vector<8x16xf32>
    %cst_56 = arith.constant 0.000000e+00 : f32
    %122 = vector.broadcast %cst_56 : f32 to vector<8x8xf32>
    %123 = arith.cmpf one, %0, %122 : vector<8x8xf32>
    %124 = arith.extui %123 : vector<8x8xi1> to vector<8x8xi32>
    %125 = arith.sitofp %124 : vector<8x8xi32> to vector<8x8xf32>
    %cst_57 = arith.constant dense<0.000000e+00> : vector<8xf32>
    %126 = vector.multi_reduction <add>, %125, %cst_57 [1] : vector<8x8xf32> to vector<8xf32>
    %127 = vector.shape_cast %126 : vector<8xf32> to vector<8x1xf32>
    %128 = vector.shape_cast %127 : vector<8x1xf32> to vector<1x8x1xf32>
    %cst_58 = arith.constant dense<0.000000e+00> : vector<1xf32>
    %129 = vector.multi_reduction <add>, %128, %cst_58 [1, 2] : vector<1x8x1xf32> to vector<1xf32>
    %130 = vector.shape_cast %129 : vector<1xf32> to vector<1x1x1xf32>
    %131 = vector.extract %130[0, 0, 0] : f32 from vector<1x1x1xf32>
    %cst_59 = arith.constant 1.000000e+00 : f32
    %132 = arith.maximumf %131, %cst_59 : f32
    %133 = arith.truncf %125 : vector<8x8xf32> to vector<8x8xbf16>
    %134 = arith.truncf %121 : vector<8x16xf32> to vector<8x16xbf16>
    %cst_60 = arith.constant dense<0.000000e+00> : vector<8x16xf32>
    %135 = tpu.matmul %133, %134, %cst_60 {dimension_numbers = #tpu.dot_dimension_numbers<[1], [0], [0], [1], [0, 0, 1, 1], [], []>} : vector<8x8xbf16>, vector<8x16xbf16>, vector<8x16xf32> -> vector<8x16xf32>
    %136 = arith.mulf %121, %121 : vector<8x16xf32>
    %137 = arith.truncf %136 : vector<8x16xf32> to vector<8x16xbf16>
    %cst_61 = arith.constant dense<0.000000e+00> : vector<8x16xf32>
    %138 = tpu.matmul %133, %137, %cst_61 {dimension_numbers = #tpu.dot_dimension_numbers<[1], [0], [0], [1], [0, 0, 1, 1], [], []>} : vector<8x8xbf16>, vector<8x16xbf16>, vector<8x16xf32> -> vector<8x16xf32>
    %139 = vector.broadcast %127 : vector<8x1xf32> to vector<8x16xf32>
    %140 = arith.mulf %139, %121 : vector<8x16xf32>
    %141 = arith.addf %140, %135 : vector<8x16xf32>
    %cst_62 = arith.constant dense<0.000000e+00> : vector<16xf32>
    %142 = vector.multi_reduction <add>, %141, %cst_62 [0] : vector<8x16xf32> to vector<16xf32>
    %143 = vector.shape_cast %142 : vector<16xf32> to vector<1x16xf32>
    %144 = arith.mulf %121, %121 : vector<8x16xf32>
    %145 = vector.broadcast %127 : vector<8x1xf32> to vector<8x16xf32>
    %146 = arith.mulf %145, %144 : vector<8x16xf32>
    %147 = arith.addf %146, %138 : vector<8x16xf32>
    %cst_63 = arith.constant 2.000000e+00 : f32
    %148 = vector.broadcast %cst_63 : f32 to vector<8x16xf32>
    %149 = arith.mulf %148, %121 : vector<8x16xf32>
    %150 = arith.mulf %149, %135 : vector<8x16xf32>
    %151 = arith.addf %147, %150 : vector<8x16xf32>
    %cst_64 = arith.constant dense<0.000000e+00> : vector<16xf32>
    %152 = vector.multi_reduction <add>, %151, %cst_64 [0] : vector<8x16xf32> to vector<16xf32>
    %153 = vector.shape_cast %152 : vector<16xf32> to vector<1x16xf32>
    %154 = vector.broadcast %132 : f32 to vector<1x16xf32>
    %155 = arith.divf %143, %154 : vector<1x16xf32>
    %156 = vector.broadcast %132 : f32 to vector<1x16xf32>
    %157 = arith.divf %153, %156 : vector<1x16xf32>
    %158 = arith.mulf %155, %155 : vector<1x16xf32>
    %159 = arith.subf %157, %158 : vector<1x16xf32>
    %cst_65 = arith.constant 0.000000e+00 : f32
    %160 = vector.broadcast %cst_65 : f32 to vector<1x16xf32>
    %161 = arith.maximumf %159, %160 : vector<1x16xf32>
    %cst_66 = arith.constant 9.99999974E-6 : f32
    %162 = vector.broadcast %cst_66 : f32 to vector<1x16xf32>
    %163 = arith.addf %161, %162 : vector<1x16xf32>
    %164 = math.rsqrt %163 : vector<1x16xf32>
    %165 = vector.broadcast %164 : vector<1x16xf32> to vector<8x16xf32>
    %166 = arith.mulf %121, %165 : vector<8x16xf32>
    %c0_67 = arith.constant 0 : index
    %c0_68 = arith.constant 0 : index
    %167 = vector.load %arg12[%c0_67, %c0_68] : memref<8x16xf32, #tpu.memory_space<vmem>>, vector<8x16xf32>
    tpu.vector_store %arg12[%c0_67, %c0_68], %166 {strides = array<i32>} : memref<8x16xf32, #tpu.memory_space<vmem>>, vector<8x16xf32>,
    %168 = vector.broadcast %155 : vector<1x16xf32> to vector<8x16xf32>
    %169 = arith.subf %121, %168 : vector<8x16xf32>
    %170 = vector.broadcast %164 : vector<1x16xf32> to vector<8x16xf32>
    %171 = arith.mulf %169, %170 : vector<8x16xf32>
    %c0_69 = arith.constant 0 : index
    %c0_70 = arith.constant 0 : index
    %172 = vector.load %arg13[%c0_69, %c0_70] : memref<8x16xf32, #tpu.memory_space<vmem>>, vector<8x16xf32>
    tpu.vector_store %arg13[%c0_69, %c0_70], %171 {strides = array<i32>} : memref<8x16xf32, #tpu.memory_space<vmem>>, vector<8x16xf32>,
    return
  }
}

</mosaic_0001>

<llo_original>
// kernel: tpu_custom_call.1
$region0: #{tpu_custom_call.1}
  #allocation0 [shape = 'u32[]', space=smem, size = 0x4, offset = 0x4, fixed_abs, tag = 'smem constant byte address 0x4 - core index']
  #allocation1 [shape = 'u32[72,128]{1,0:T(1,128)}', space=vmem, size = 0x9000, scoped, tag = 'internal scratch']
  %s0 = inlined_call_operand.hbm [shape: f32[8,8], index: 0, kind: input, shape index: {}]
  %s1 = inlined_call_operand.hbm [shape: f32[8,16], index: 1, kind: input, shape index: {}]
  %s2 = inlined_call_operand.vmem [shape: f32[16,32], index: 2, kind: input, shape index: {}]
  %s3 = inlined_call_operand.vmem [shape: f32[1,32], index: 3, kind: input, shape index: {}]
  %s4 = inlined_call_operand.vmem [shape: f32[32,32], index: 4, kind: input, shape index: {}]
  %s5 = inlined_call_operand.vmem [shape: f32[1,32], index: 5, kind: input, shape index: {}]
  %s6 = inlined_call_operand.vmem [shape: f32[32,32], index: 6, kind: input, shape index: {}]
  %s7 = inlined_call_operand.vmem [shape: f32[1,32], index: 7, kind: input, shape index: {}]
  %s8 = inlined_call_operand.vmem [shape: f32[32,16], index: 8, kind: input, shape index: {}]
  %s9 = inlined_call_operand.vmem [shape: f32[32,16], index: 9, kind: input, shape index: {}]
  %s10 = inlined_call_operand.vmem [shape: f32[1,16], index: 10, kind: input, shape index: {}]
  %s11 = inlined_call_operand.vmem [shape: f32[1,16], index: 11, kind: input, shape index: {}]
  %s12 = inlined_call_operand.hbm [shape: f32[8,16], index: 12, kind: output, shape index: {0}]
  %s13 = inlined_call_operand.hbm [shape: f32[8,16], index: 13, kind: output, shape index: {1}]
  %s14 = inlined_call_operand.hbm [shape: bf16[8,8], index: 14, kind: output, shape index: {2}]
  %15 = xla_tuple %s12, %s13, %s14
  %s16 = sld [smem:[#allocation0]]
  $region82: #{tpu_custom_call.1} parent=0
    _
  %s18 = ssub.s32 1, %s16
  %s19 = scalar_select 0, %s18, %s16
  $region1: #{tpu_custom_call.1} parent=0
    #allocation2 [shape = 'u8[4096]{0}', space=vmem, size = 0x1000, scoped, tag = 'input window, operand 0, single buffered']
    #allocation3 [shape = 's32[1]{0}', space=sflag, size = 0x4, scoped, tag = 'scoped memory for tpu_custom_call.1']
    #allocation4 [shape = 's32[1]{0}', space=sflag, size = 0x4, scoped, tag = 'scoped memory for tpu_custom_call.1']
    #allocation5 [shape = 'u8[4096]{0}', space=vmem, size = 0x1000, scoped, tag = 'input window, operand 1, single buffered']
    #allocation6 [shape = 's32[1]{0}', space=sflag, size = 0x4, scoped, tag = 'scoped memory for tpu_custom_call.1']
    #allocation7 [shape = 'u8[4096]{0}', space=vmem, size = 0x1000, scoped, tag = 'output window, operand 0, single buffered']
    #allocation8 [shape = 'u8[4096]{0}', space=vmem, size = 0x1000, scoped, tag = 'output window, operand 1, single buffered']
    #allocation9 [shape = 's32[1]{0}', space=sflag, size = 0x4, scoped, tag = 'scoped memory for tpu_custom_call.1']
    #allocation10 [shape = 'u8[2048]{0}', space=vmem, size = 0x800, scoped, tag = 'output window, operand 2, single buffered']
    %20 = vsyncpa [#allocation3], 0
    %21 = vsyncpa [#allocation6], 0
    %22 = vsyncpa [#allocation4], 0
    %23 = vsyncpa [#allocation9], 0
    // Predicated region
    $region2: #{tpu_custom_call.1} parent=1 // pred_check
      _
    $region3: #{tpu_custom_call.1} parent=1 // pred_check_branch
      %25 = sbr.rel (0) target = $region5
    $region4: #{tpu_custom_call.1} parent=1 // pred_region
      %27 = vsyncadd [#allocation3], 0
      %s29 = sshll.u32 %s0, 4
      %s30 = int_to_ptr.hbm [resolvable:$true] %s29
      %s31 = sshll.u32 [#allocation2], 4
      %s32 = int_to_ptr.vmem [resolvable:$true] %s31
      %34 = dma.hbm_to_vmem [thread:$0]  %s30, 128, %s32, [#allocation3]
    $region5: #{tpu_custom_call.1} parent=1 // pred_fallthru
      _
    // Predicated region
    $region6: #{tpu_custom_call.1} parent=1 // pred_check
      _
    $region7: #{tpu_custom_call.1} parent=1 // pred_check_branch
      %36 = sbr.rel (0) target = $region9
    $region8: #{tpu_custom_call.1} parent=1 // pred_region
      %38 = vsyncadd [#allocation6], 0
      %s40 = sshll.u32 %s1, 4
      %s41 = int_to_ptr.hbm [resolvable:$true] %s40
      %s42 = sshll.u32 [#allocation5], 4
      %s43 = int_to_ptr.vmem [resolvable:$true] %s42
      %45 = dma.hbm_to_vmem [thread:$0]  %s41, 128, %s43, [#allocation6]
    $region9: #{tpu_custom_call.1} parent=1 // pred_fallthru
      _
    // Predicated region
    $region10: #{tpu_custom_call.1} parent=1 // pred_check
      _
    $region11: #{tpu_custom_call.1} parent=1 // pred_check_branch
      %47 = sbr.rel (0) target = $region13
    $region12: #{tpu_custom_call.1} parent=1 // pred_region
      _
    $region13: #{tpu_custom_call.1} parent=1 // pred_fallthru
      _
    // Predicated region
    $region14: #{tpu_custom_call.1} parent=1 // pred_check
      _
    $region15: #{tpu_custom_call.1} parent=1 // pred_check_branch
      %49 = sbr.rel (0) target = $region17
    $region16: #{tpu_custom_call.1} parent=1 // pred_region
      _
    $region17: #{tpu_custom_call.1} parent=1 // pred_fallthru
      _
    // Predicated region
    $region18: #{tpu_custom_call.1} parent=1 // pred_check
      _
    $region19: #{tpu_custom_call.1} parent=1 // pred_check_branch
      %51 = sbr.rel (0) target = $region21
    $region20: #{tpu_custom_call.1} parent=1 // pred_region
      _
    $region21: #{tpu_custom_call.1} parent=1 // pred_fallthru
      _
    // Predicated region
    $region22: #{tpu_custom_call.1} parent=1 // pred_check
      _
    $region23: #{tpu_custom_call.1} parent=1 // pred_check_branch
      %53 = sbr.rel (0) target = $region25
    $region24: #{tpu_custom_call.1} parent=1 // pred_region
      _
    $region25: #{tpu_custom_call.1} parent=1 // pred_fallthru
      _
    // Predicated region
    $region26: #{tpu_custom_call.1} parent=1 // pred_check
      _
    $region27: #{tpu_custom_call.1} parent=1 // pred_check_branch
      %55 = sbr.rel (0) target = $region29
    $region28: #{tpu_custom_call.1} parent=1 // pred_region
      _
    $region29: #{tpu_custom_call.1} parent=1 // pred_fallthru
      _
    // Predicated region
    $region30: #{tpu_custom_call.1} parent=1 // pred_check
      _
    $region31: #{tpu_custom_call.1} parent=1 // pred_check_branch
      %57 = sbr.rel (0) target = $region33
    $region32: #{tpu_custom_call.1} parent=1 // pred_region
      _
    $region33: #{tpu_custom_call.1} parent=1 // pred_fallthru
      _
    // Predicated region
    $region34: #{tpu_custom_call.1} parent=1 // pred_check
      _
    $region35: #{tpu_custom_call.1} parent=1 // pred_check_branch
      %59 = sbr.rel (0) target = $region37
    $region36: #{tpu_custom_call.1} parent=1 // pred_region
      _
    $region37: #{tpu_custom_call.1} parent=1 // pred_fallthru
      _
    // Predicated region
    $region38: #{tpu_custom_call.1} parent=1 // pred_check
      _
    $region39: #{tpu_custom_call.1} parent=1 // pred_check_branch
      %61 = sbr.rel (0) target = $region41
    $region40: #{tpu_custom_call.1} parent=1 // pred_region
      _
    $region41: #{tpu_custom_call.1} parent=1 // pred_fallthru
      _
    // Predicated region
    $region42: #{tpu_custom_call.1} parent=1 // pred_check
      _
    $region43: #{tpu_custom_call.1} parent=1 // pred_check_branch
      %63 = sbr.rel (0) target = $region45
    $region44: #{tpu_custom_call.1} parent=1 // pred_region
      _
    $region45: #{tpu_custom_call.1} parent=1 // pred_fallthru
      _
    // Predicated region
    $region46: #{tpu_custom_call.1} parent=1 // pred_check
      _
    $region47: #{tpu_custom_call.1} parent=1 // pred_check_branch
      %65 = sbr.rel (0) target = $region49
    $region48: #{tpu_custom_call.1} parent=1 // pred_region
      _
    $region49: #{tpu_custom_call.1} parent=1 // pred_fallthru
      _
    // Predicated region
    $region50: #{tpu_custom_call.1} parent=1 // pred_check
      _
    $region51: #{tpu_custom_call.1} parent=1 // pred_check_branch
      %67 = sbr.rel (0) target = $region53
    $region52: #{tpu_custom_call.1} parent=1 // pred_region
      %69 = dma.done [#allocation3], 128
    $region53: #{tpu_custom_call.1} parent=1 // pred_fallthru
      _
    // Predicated region
    $region54: #{tpu_custom_call.1} parent=1 // pred_check
      _
    $region55: #{tpu_custom_call.1} parent=1 // pred_check_branch
      %71 = sbr.rel (0) target = $region57
    $region56: #{tpu_custom_call.1} parent=1 // pred_region
      %73 = dma.done [#allocation6], 128
    $region57: #{tpu_custom_call.1} parent=1 // pred_fallthru
      _
    %v75 = vld [vmem:[#allocation2] sm:$0xff]
    %v76 = vld [vmem:[#allocation5] sm:$0xff]
    %v77 = vmax.f32 %v76, -10.0
    %v78 = vmin.f32 %v77, 10.0
    %v79 = vmax.f32 %v75, 0.0
    %v80 = vmin.f32 %v79, 1.0
    %vm81 = vcmask 64512
    %v82 = vsel %vm81, %v80, 0.0
    %83 = vadd.xlane.f32.xlu0 %v82
    %v84 = vpop.xlane.xlu0 %83
    %v85 = vadd.f32 %v84, 1e-08
    %v86 = vrcp.pop %v85
    %v87 = vmul.f32 %v85, %v86
    %v88 = vsub.f32 1.0, %v87
    %v89 = vmul.f32 %v86, %v88
    %v90 = vadd.f32 %v86, %v89
    %vm91 = vweird.f32 %v85
    %vm92 = vweird.f32 %v86
    %vm93 = vmor %vm91, %vm92
    %v94 = vsel %vm93, %v86, %v90
    %v95 = vand.u32 2147483647, %v85
    %vm96 = vcmp.eq.f32.partialorder %v95, 8.507059e+37
    %v97 = vand.u32 %v85, 2147483648
    %v98 = vor.u32 1.1754944e-38, %v97
    %v99 = vsel %vm96, %v98, %v94
    %v100 = vmul.f32 %v80, %v99
    %v101 = vpack.c.bf16 %v100, %v100
    %vm102 = vcmask 60416
    %103 = vst.msk [vmem:[#allocation10] sm:$0xf] %vm102, %v101
    %v104 = vld [vmem:[%s2] sm:$0xff]
    %v105 = vld [vmem:[%s2 + $0x8] sm:$0xff]
    %v106 = vld [vmem:[%s3] sm:$0x1]
    %v107 = vld [vmem:[%s4] sm:$0xff]
    %v108 = vld [vmem:[%s4 + $0x8] sm:$0xff]
    %v109 = vld [vmem:[%s4 + $0x10] sm:$0xff]
    %v110 = vld [vmem:[%s4 + $0x18] sm:$0xff]
    %v111 = vld [vmem:[%s5] sm:$0x1]
    %v112 = vld [vmem:[%s6] sm:$0xff]
    %v113 = vld [vmem:[%s6 + $0x8] sm:$0xff]
    %v114 = vld [vmem:[%s6 + $0x10] sm:$0xff]
    %v115 = vld [vmem:[%s6 + $0x18] sm:$0xff]
    %v116 = vld [vmem:[%s7] sm:$0x1]
    %v117 = vpack.c.bf16 %v78, %v78
    %v118 = vpack.c.bf16 %v105, %v104
    %v120 = vperm.slane %v106, 0
    %vm122 = vcmask 130048
    %v124 = vsel %vm122, %v117, 0
    %126 = vmatpush.bf16.msra.mxu0 0
    %127 = vmatpush.bf16.msra.mxu0 0
    %128 = vmatpush.bf16.msra.mxu0 0
    %129 = vmatpush.bf16.msra.mxu0 0
    %130 = vmatpush.bf16.msra.mxu0 0
    %131 = vmatpush.bf16.msra.mxu0 0
    %132 = vmatpush.bf16.msra.mxu0 0
    %133 = vmatpush.bf16.msra.mxu0 %v118
    %134 = vmatmul.bf16.gmra.mxu0 %v124
    %v135 = vpop.f32.mrf.mxu0
    %v136 = vadd.f32 %v120, %v135
    %v137 = vpop.f32.mrf.mxu0
    %138 = vdwg.mxu0
    %vm139 = vcmask 261120
    %v140 = vsel %vm139, %v136, 0.0
    %v141 = vrot.slane %v140, 4
    %v142 = vadd.f32 %v140, %v141
    %v143 = vrot.slane %v142, 2
    %v144 = vadd.f32 %v142, %v143
    %v145 = vrot.slane %v144, 1
    %v146 = vadd.f32 %v144, %v145
    %v147 = vrcp.pop 8.0
    %v148 = vmul.f32 8.0, %v147
    %v149 = vsub.f32 1.0, %v148
    %v150 = vmul.f32 %v147, %v149
    %v151 = vadd.f32 %v147, %v150
    %vm152 = vweird.f32 %v147
    %v153 = vsel %vm152, %v147, %v151
    %v154 = vmul.f32 %v146, %v153
    %v155 = vsub.f32 %v136, %v154
    %v156 = vmul.f32 %v155, %v155
    %v157 = vsel %vm139, %v156, 0.0
    %v158 = vrot.slane %v157, 4
    %v159 = vadd.f32 %v157, %v158
    %v160 = vrot.slane %v159, 2
    %v161 = vadd.f32 %v159, %v160
    %v162 = vrot.slane %v161, 1
    %v163 = vadd.f32 %v161, %v162
    %v164 = vmul.f32 %v163, %v153
    %v165 = vadd.f32 %v164, 1e-05
    %v166 = vrsqrt.pop %v165
    %v167 = vmul.f32 %v166, %v165
    %v168 = vmul.f32 %v167, %v166
    %v169 = vmul.f32 0.5, %v168
    %v170 = vsub.f32 1.5, %v169
    %v171 = vmul.f32 %v166, %v170
    %vm172 = vweird.f32 %v165
    %vm173 = vweird.f32 %v166
    %vm174 = vmor %vm172, %vm173
    %v175 = vsel %vm174, %v166, %v171
    %v176 = vmul.f32 %v155, %v175
    %v177 = vmax.f32 %v176, 0.0
    %v178 = vpack.c.bf16 %v177, %v177
    %v179 = vpack.c.bf16 %v108, %v107
    %v180 = vpack.c.bf16 %v110, %v109
    %v182 = vperm.slane %v111, 0
    %v185 = vsel %vm139, %v178, 0
    %187 = vmatpush.bf16.msra.mxu0 0
    %188 = vmatpush.bf16.msra.mxu0 0
    %189 = vmatpush.bf16.msra.mxu0 0
    %190 = vmatpush.bf16.msra.mxu0 0
    %191 = vmatpush.bf16.msra.mxu0 0
    %192 = vmatpush.bf16.msra.mxu0 0
    %193 = vmatpush.bf16.msra.mxu0 %v180
    %194 = vmatpush.bf16.msra.mxu0 %v179
    %195 = vmatmul.bf16.gmra.mxu0 %v185
    %v196 = vpop.f32.mrf.mxu0
    %v197 = vadd.f32 %v182, %v196
    %v198 = vpop.f32.mrf.mxu0
    %199 = vdwg.mxu0
    %v200 = vsel %vm139, %v197, 0.0
    %v201 = vrot.slane %v200, 4
    %v202 = vadd.f32 %v200, %v201
    %v203 = vrot.slane %v202, 2
    %v204 = vadd.f32 %v202, %v203
    %v205 = vrot.slane %v204, 1
    %v206 = vadd.f32 %v204, %v205
    %v207 = vmul.f32 %v206, %v153
    %v208 = vsub.f32 %v197, %v207
    %v209 = vmul.f32 %v208, %v208
    %v210 = vsel %vm139, %v209, 0.0
    %v211 = vrot.slane %v210, 4
    %v212 = vadd.f32 %v210, %v211
    %v213 = vrot.slane %v212, 2
    %v214 = vadd.f32 %v212, %v213
    %v215 = vrot.slane %v214, 1
    %v216 = vadd.f32 %v214, %v215
    %v217 = vmul.f32 %v216, %v153
    %v218 = vadd.f32 %v217, 1e-05
    %v219 = vrsqrt.pop %v218
    %v220 = vmul.f32 %v219, %v218
    %v221 = vmul.f32 %v220, %v219
    %v222 = vmul.f32 0.5, %v221
    %v223 = vsub.f32 1.5, %v222
    %v224 = vmul.f32 %v219, %v223
    %vm225 = vweird.f32 %v218
    %vm226 = vweird.f32 %v219
    %vm227 = vmor %vm225, %vm226
    %v228 = vsel %vm227, %v219, %v224
    %v229 = vmul.f32 %v208, %v228
    %v230 = vmax.f32 %v229, 0.0
    %v231 = vpack.c.bf16 %v230, %v230
    %v233 = vsel %vm81, %v101, 0
    %vm235 = vcmask 1043456
    %v237 = vsel %vm235, %v231, 0
    %239 = vmatpush.bf16.msra.mxu0 0
    %240 = vmatpush.bf16.msra.mxu0 0
    %241 = vmatpush.bf16.msra.mxu0 0
    %242 = vmatpush.bf16.msra.mxu0 0
    %243 = vmatpush.bf16.msra.mxu0 0
    %244 = vmatpush.bf16.msra.mxu0 0
    %245 = vmatpush.bf16.msra.mxu0 0
    %246 = vmatpush.bf16.msra.mxu0 %v237
    %247 = vmatmul.bf16.gmra.mxu0 %v233
    %v248 = vpop.f32.mrf.mxu0
    %v249 = vadd.f32 0.0, %v248
    %v250 = vpop.f32.mrf.mxu0
    %251 = vdwg.mxu0
    %v252 = vadd.f32 %v177, %v249
    %v253 = vpack.c.bf16 %v252, %v252
    %v254 = vpack.c.bf16 %v113, %v112
    %v255 = vpack.c.bf16 %v115, %v114
    %v257 = vperm.slane %v116, 0
    %v260 = vsel %vm139, %v253, 0
    %262 = vmatpush.bf16.msra.mxu0 0
    %263 = vmatpush.bf16.msra.mxu0 0
    %264 = vmatpush.bf16.msra.mxu0 0
    %265 = vmatpush.bf16.msra.mxu0 0
    %266 = vmatpush.bf16.msra.mxu0 0
    %267 = vmatpush.bf16.msra.mxu0 0
    %268 = vmatpush.bf16.msra.mxu0 %v255
    %269 = vmatpush.bf16.msra.mxu0 %v254
    %270 = vmatmul.bf16.gmra.mxu0 %v260
    %v271 = vpop.f32.mrf.mxu0
    %v272 = vadd.f32 %v257, %v271
    %v273 = vpop.f32.mrf.mxu0
    %274 = vdwg.mxu0
    %v275 = vsel %vm139, %v272, 0.0
    %v276 = vrot.slane %v275, 4
    %v277 = vadd.f32 %v275, %v276
    %v278 = vrot.slane %v277, 2
    %v279 = vadd.f32 %v277, %v278
    %v280 = vrot.slane %v279, 1
    %v281 = vadd.f32 %v279, %v280
    %v282 = vmul.f32 %v281, %v153
    %v283 = vsub.f32 %v272, %v282
    %v284 = vmul.f32 %v283, %v283
    %v285 = vsel %vm139, %v284, 0.0
    %v286 = vrot.slane %v285, 4
    %v287 = vadd.f32 %v285, %v286
    %v288 = vrot.slane %v287, 2
    %v289 = vadd.f32 %v287, %v288
    %v290 = vrot.slane %v289, 1
    %v291 = vadd.f32 %v289, %v290
    %v292 = vmul.f32 %v291, %v153
    %v293 = vadd.f32 %v292, 1e-05
    %v294 = vrsqrt.pop %v293
    %v295 = vmul.f32 %v294, %v293
    %v296 = vmul.f32 %v295, %v294
    %v297 = vmul.f32 0.5, %v296
    %v298 = vsub.f32 1.5, %v297
    %v299 = vmul.f32 %v294, %v298
    %vm300 = vweird.f32 %v293
    %vm301 = vweird.f32 %v294
    %vm302 = vmor %vm300, %vm301
    %v303 = vsel %vm302, %v294, %v299
    %v304 = vmul.f32 %v283, %v303
    %v305 = vtanh.pop %v304
    %v306 = vsel %vm139, %v305, 0.0
    %v307 = vrot.slane %v306, 4
    %v308 = vadd.f32 %v306, %v307
    %v309 = vrot.slane %v308, 2
    %v310 = vadd.f32 %v308, %v309
    %v311 = vrot.slane %v310, 1
    %v312 = vadd.f32 %v310, %v311
    %v313 = vmul.f32 %v312, %v153
    %v314 = vld [vmem:[%s8] sm:$0xff]
    %v315 = vld [vmem:[%s8 + $0x8] sm:$0xff]
    %v316 = vld [vmem:[%s8 + $0x10] sm:$0xff]
    %v317 = vld [vmem:[%s8 + $0x18] sm:$0xff]
    %v318 = vpack.c.bf16 %v305, %v305
    %v319 = vpack.c.bf16 %v315, %v314
    %v320 = vpack.c.bf16 %v317, %v316
    %v321 = vld [vmem:[%s9] sm:$0xff]
    %v322 = vld [vmem:[%s9 + $0x8] sm:$0xff]
    %v323 = vld [vmem:[%s9 + $0x10] sm:$0xff]
    %v324 = vld [vmem:[%s9 + $0x18] sm:$0xff]
    %v325 = vpack.c.bf16 %v313, %v313
    %v326 = vpack.c.bf16 %v322, %v321
    %v327 = vpack.c.bf16 %v324, %v323
    %v328 = vld [vmem:[%s10] sm:$0x1]
    %v330 = vsel %vm139, %v325, 0
    %332 = vmatpush.bf16.msra.mxu0 0
    %333 = vmatpush.bf16.msra.mxu0 0
    %334 = vmatpush.bf16.msra.mxu0 0
    %335 = vmatpush.bf16.msra.mxu0 0
    %336 = vmatpush.bf16.msra.mxu0 0
    %337 = vmatpush.bf16.msra.mxu0 0
    %338 = vmatpush.bf16.msra.mxu0 %v327
    %339 = vmatpush.bf16.msra.mxu0 %v326
    %340 = vmatmul.bf16.gmra.mxu0 %v330
    %v341 = vpop.f32.mrf.mxu0
    %v342 = vadd.f32 %v328, %v341
    %v343 = vpop.f32.mrf.mxu0
    %344 = vdwg.mxu0
    %v345 = vld [vmem:[%s11] sm:$0x1]
    %v346 = vadd.f32 %v342, %v345
    %v347 = vmul.f32 %v346, 0.5
    %v348 = vperm.slane %v347, 0
    %v350 = vsel %vm139, %v318, 0
    %352 = vmatpush.bf16.msra.mxu0 0
    %353 = vmatpush.bf16.msra.mxu0 0
    %354 = vmatpush.bf16.msra.mxu0 0
    %355 = vmatpush.bf16.msra.mxu0 0
    %356 = vmatpush.bf16.msra.mxu0 0
    %357 = vmatpush.bf16.msra.mxu0 0
    %358 = vmatpush.bf16.msra.mxu0 %v320
    %359 = vmatpush.bf16.msra.mxu0 %v319
    %360 = vmatmul.bf16.gmra.mxu0 %v350
    %v361 = vpop.f32.mrf.mxu0
    %v362 = vadd.f32 %v348, %v361
    %v363 = vpop.f32.mrf.mxu0
    %364 = vdwg.mxu0
    %vm365 = vcmp.ne.f32.partialorder %v75, 0.0
    %v366 = vsel %vm365, 1, 0
    %v367 = vcvt.s32.f32 %v366
    %v368 = vsel %vm81, %v367, 0.0
    %369 = vadd.xlane.f32.xlu0 %v368
    %v370 = vpop.xlane.xlu0 %369
    %vm371 = vcmask 7168
    %v372 = vsel %vm371, %v370, 0.0
    %373 = vadd.xlane.f32.xlu0 %v372
    %v374 = vpop.xlane.xlu0 %373
    %v375 = vrot.slane %v374, 4
    %v376 = vadd.f32 %v374, %v375
    %v377 = vrot.slane %v376, 2
    %v378 = vadd.f32 %v376, %v377
    %v379 = vrot.slane %v378, 1
    %v380 = vadd.f32 %v378, %v379
    %s381 = vtos %v380
    %s382 = smax.f32 %s381, 1.0
    %v383 = vpack.c.bf16 %v367, %v367
    %v384 = vpack.c.bf16 %v362, %v362
    %v386 = vsel %vm81, %v383, 0
    %v389 = vsel %vm235, %v384, 0
    %391 = vmatpush.bf16.msra.mxu0 0
    %392 = vmatpush.bf16.msra.mxu0 0
    %393 = vmatpush.bf16.msra.mxu0 0
    %394 = vmatpush.bf16.msra.mxu0 0
    %395 = vmatpush.bf16.msra.mxu0 0
    %396 = vmatpush.bf16.msra.mxu0 0
    %397 = vmatpush.bf16.msra.mxu0 0
    %398 = vmatpush.bf16.msra.mxu0 %v389
    %399 = vmatmul.bf16.gmra.mxu0 %v386
    %v400 = vpop.f32.mrf.mxu0
    %v401 = vadd.f32 0.0, %v400
    %v402 = vpop.f32.mrf.mxu0
    %403 = vdwg.mxu0
    %v404 = vmul.f32 %v362, %v362
    %v405 = vpack.c.bf16 %v404, %v404
    %v407 = vsel %vm235, %v405, 0
    %409 = vmatpush.bf16.msra.mxu0 0
    %410 = vmatpush.bf16.msra.mxu0 0
    %411 = vmatpush.bf16.msra.mxu0 0
    %412 = vmatpush.bf16.msra.mxu0 0
    %413 = vmatpush.bf16.msra.mxu0 0
    %414 = vmatpush.bf16.msra.mxu0 0
    %415 = vmatpush.bf16.msra.mxu0 0
    %416 = vmatpush.bf16.msra.mxu0 %v407
    %417 = vmatmul.bf16.gmra.mxu0 %v386
    %v418 = vpop.f32.mrf.mxu0
    %v419 = vadd.f32 0.0, %v418
    %v420 = vpop.f32.mrf.mxu0
    %421 = vdwg.mxu0
    %v422 = vmul.f32 %v370, %v362
    %v423 = vadd.f32 %v422, %v401
    %v424 = vsel %vm122, %v423, 0.0
    %v425 = vrot.slane %v424, 4
    %v426 = vadd.f32 %v424, %v425
    %v427 = vrot.slane %v426, 2
    %v428 = vadd.f32 %v426, %v427
    %v429 = vrot.slane %v428, 1
    %v430 = vadd.f32 %v428, %v429
    %v431 = vmul.f32 %v370, %v404
    %v432 = vadd.f32 %v431, %v419
    %v433 = vmul.f32 %v362, 2.0
    %v434 = vmul.f32 %v433, %v401
    %v435 = vadd.f32 %v432, %v434
    %v436 = vsel %vm122, %v435, 0.0
    %v437 = vrot.slane %v436, 4
    %v438 = vadd.f32 %v436, %v437
    %v439 = vrot.slane %v438, 2
    %v440 = vadd.f32 %v438, %v439
    %v441 = vrot.slane %v440, 1
    %v442 = vadd.f32 %v440, %v441
    %v443 = vstv %s382
    %v444 = vrcp.pop %v443
    %v445 = vmul.f32 %v443, %v444
    %v446 = vsub.f32 1.0, %v445
    %v447 = vmul.f32 %v444, %v446
    %v448 = vadd.f32 %v444, %v447
    %vm449 = vweird.f32 %v443
    %vm450 = vweird.f32 %v444
    %vm451 = vmor %vm449, %vm450
    %v452 = vsel %vm451, %v444, %v448
    %v453 = vand.u32 2147483647, %v443
    %vm454 = vcmp.eq.f32.partialorder %v453, 8.507059e+37
    %v455 = vand.u32 %v443, 2147483648
    %v456 = vor.u32 1.1754944e-38, %v455
    %v457 = vsel %vm454, %v456, %v452
    %v458 = vmul.f32 %v430, %v457
    %v459 = vmul.f32 %v442, %v457
    %v460 = vmul.f32 %v458, %v458
    %v461 = vsub.f32 %v459, %v460
    %v462 = vmax.f32 %v461, 0.0
    %v463 = vadd.f32 %v462, 1e-05
    %v464 = vrsqrt.pop %v463
    %v465 = vmul.f32 %v464, %v463
    %v466 = vmul.f32 %v465, %v464
    %v467 = vmul.f32 0.5, %v466
    %v468 = vsub.f32 1.5, %v467
    %v469 = vmul.f32 %v464, %v468
    %vm470 = vweird.f32 %v463
    %vm471 = vweird.f32 %v464
    %vm472 = vmor %vm470, %vm471
    %v473 = vsel %vm472, %v464, %v469
    %v474 = vmul.f32 %v362, %v473
    %475 = vst.msk [vmem:[#allocation7] sm:$0xff] %vm122, %v474
    %v476 = vsub.f32 %v362, %v458
    %v477 = vmul.f32 %v476, %v473
    %478 = vst.msk [vmem:[#allocation8] sm:$0xff] %vm122, %v477
    // Predicated region
    $region58: #{tpu_custom_call.1} parent=1 // pred_check
      _
    $region59: #{tpu_custom_call.1} parent=1 // pred_check_branch
      %480 = sbr.rel (0) target = $region61
    $region60: #{tpu_custom_call.1} parent=1 // pred_region
      %482 = vsyncadd [#allocation4], 0
      %s484 = sshll.u32 [#allocation7], 4
      %s485 = int_to_ptr.vmem [resolvable:$true] %s484
      %s486 = sshll.u32 %s12, 4
      %s487 = int_to_ptr.hbm [resolvable:$true] %s486
      %489 = dma.vmem_to_hbm [thread:$0]  %s485, 128, %s487, [#allocation4]
    $region61: #{tpu_custom_call.1} parent=1 // pred_fallthru
      _
    // Predicated region
    $region62: #{tpu_custom_call.1} parent=1 // pred_check
      _
    $region63: #{tpu_custom_call.1} parent=1 // pred_check_branch
      %491 = sbr.rel (0) target = $region65
    $region64: #{tpu_custom_call.1} parent=1 // pred_region
      %493 = vsyncadd [#allocation9], 0
      %s495 = sshll.u32 [#allocation8], 4
      %s496 = int_to_ptr.vmem [resolvable:$true] %s495
      %s497 = sshll.u32 %s13, 4
      %s498 = int_to_ptr.hbm [resolvable:$true] %s497
      %500 = dma.vmem_to_hbm [thread:$0]  %s496, 128, %s498, [#allocation9]
    $region65: #{tpu_custom_call.1} parent=1 // pred_fallthru
      _
    // Predicated region
    $region66: #{tpu_custom_call.1} parent=1 // pred_check
      _
    $region67: #{tpu_custom_call.1} parent=1 // pred_check_branch
      %502 = sbr.rel (0) target = $region69
    $region68: #{tpu_custom_call.1} parent=1 // pred_region
      %504 = vsyncadd [#allocation9], 0
      %s506 = sshll.u32 [#allocation10], 4
      %s507 = int_to_ptr.vmem [resolvable:$true] %s506
      %s508 = sshll.u32 %s14, 4
      %s509 = int_to_ptr.hbm [resolvable:$true] %s508
      %511 = dma.vmem_to_hbm [thread:$0]  %s507, 64, %s509, [#allocation9]
    $region69: #{tpu_custom_call.1} parent=1 // pred_fallthru
      _
    // Predicated region
    $region70: #{tpu_custom_call.1} parent=1 // pred_check
      _
    $region71: #{tpu_custom_call.1} parent=1 // pred_check_branch
      %513 = sbr.rel (0) target = $region73
    $region72: #{tpu_custom_call.1} parent=1 // pred_region
      %515 = dma.done [#allocation4], 128
    $region73: #{tpu_custom_call.1} parent=1 // pred_fallthru
      _
    // Predicated region
    $region74: #{tpu_custom_call.1} parent=1 // pred_check
      _
    $region75: #{tpu_custom_call.1} parent=1 // pred_check_branch
      %517 = sbr.rel (0) target = $region77
    $region76: #{tpu_custom_call.1} parent=1 // pred_region
      %519 = dma.done [#allocation9], 128
    $region77: #{tpu_custom_call.1} parent=1 // pred_fallthru
      _
    // Predicated region
    $region78: #{tpu_custom_call.1} parent=1 // pred_check
      _
    $region79: #{tpu_custom_call.1} parent=1 // pred_check_branch
      %521 = sbr.rel (0) target = $region81
    $region80: #{tpu_custom_call.1} parent=1 // pred_region
      %523 = dma.done [#allocation9], 64
    $region81: #{tpu_custom_call.1} parent=1 // pred_fallthru
      _
    %524 = vsyncpa [#allocation3], 1
    %525 = vsyncpa [#allocation6], 1
    %526 = vsyncpa [#allocation4], 1
    %527 = vsyncpa [#allocation9], 1

</llo_original>
